<compile_context>
chip_gen: v7x
topology: tpu7x:2x2x1
jax: 0.10.0
libtpu: 0.0.40
codegen_flags: <defaults>
</compile_context>

<pallas_src>
from functools import partial

import jax
import jax.numpy as jnp
from jax.experimental import pallas as pl
from jax.experimental.pallas import tpu as pltpu


def _dwconv3x3_kernel(x_ref, halo_ref, w_ref, b_ref, o_ref, *, C):
    # x_ref:    (1, TH, (W+2)*C)   W-padded row tile, (W, C) folded onto lanes
    # halo_ref: (1, 1, 2, (W+2)*C) row above / row below this tile (zeros at border)
    # w_ref:    (3, 3, W*C)        per-lane (channel-tiled) conv weights
    # b_ref:    (1, W*C)           per-lane bias
    # o_ref:    (1, TH, W*C)
    TH = x_ref.shape[1]
    WC = o_ref.shape[2]

    x = x_ref[0].astype(jnp.float32)             # (TH, WPC)
    halo = halo_ref[0, 0].astype(jnp.float32)    # (2, WPC)
    w = w_ref[...].astype(jnp.float32)           # (3, 3, WC)  -- cast hoisted out of the loop

    # (TH+2, WPC) row window: [row above | tile rows | row below].
    window = jnp.concatenate([halo[0:1, :], x, halo[1:2, :]], axis=0)

    acc = jnp.broadcast_to(b_ref[...].astype(jnp.float32), (TH, WC))
    # 3 W-shifted views (lane-offset slices of the W-padded window); each is then
    # read at 3 row offsets (kh) -> 9 multiply-accumulates total.
    for kw in range(3):
        xs = window[:, kw * C:kw * C + WC]       # (TH+2, WC)
        for kh in range(3):
            acc = acc + xs[kh:kh + TH, :] * w[kh, kw, :]

    o_ref[0] = acc.astype(o_ref.dtype)


def _pick_block_rows(H, row_bytes, target_bytes=1 << 20):
    """Largest multiple-of-8 divisor of H whose input tile stays under ~1 MiB."""
    divisors = [d for d in (1024, 512, 256, 128, 64, 32, 16, 8)
                if d <= H and H % d == 0]
    if not divisors:
        return H                    # no multiple-of-8 divisor: single tile
    for d in divisors:              # descending: biggest tile under budget
        if d * row_bytes <= target_bytes:
            return d
    return divisors[-1]             # smallest (= 8)


def dwconv(x, H, W, weight, bias, *, block_rows=None):
    """Depthwise 3x3 conv, stride 1, pad 1, groups=C (DWConv.forward).

    x:      (B, N, C) with N == H * W (same layout as the PyTorch module input)
    weight: (3, 3, C) -- PyTorch's (C, 1, 3, 3) depthwise weight permuted to (kh, kw, C)
    bias:   (C,)
    returns (B, N, C)
    """
    B, N, C = x.shape
    assert N == H * W
    WC = W * C
    WPC = (W + 2) * C
    itemsize = jnp.dtype(x.dtype).itemsize

    # Pad W once in HBM; flatten (W+2, C) onto the lane axis.  (B, N, C) row-major
    # is already NHWC-flat, so this is a pure reshape + pad, no transposes.
    x_wpad = jnp.pad(x.reshape(B, H, W, C), ((0, 0), (0, 0), (1, 1), (0, 0)))
    x_flat = x_wpad.reshape(B, H, WPC)

    if block_rows is None:
        block_rows = _pick_block_rows(H, WPC * itemsize)
    TH = int(block_rows)
    assert H % TH == 0, "block_rows must divide H"
    assert TH % 8 == 0 or TH == H, "block_rows must be a multiple of 8 (or == H)"
    T = H // TH

    # One-row halos above/below every row tile (zero rows at the image border),
    # so per-tile BlockSpecs stay plain, non-overlapping, fully auto-pipelined.
    tiles = x_flat.reshape(B, T, TH, WPC)
    zero_row = jnp.zeros((B, 1, WPC), x.dtype)
    tops = jnp.concatenate([zero_row, tiles[:, :-1, TH - 1, :]], axis=1)  # (B, T, WPC)
    bots = jnp.concatenate([tiles[:, 1:, 0, :], zero_row], axis=1)        # (B, T, WPC)
    halos = jnp.stack([tops, bots], axis=2)                               # (B, T, 2, WPC)

    # Per-lane parameters: channel c of image column w lives at lane w*C + c.
    w_flat = jnp.tile(weight, (1, 1, W))                                  # (3, 3, W*C)
    b_flat = jnp.tile(bias, W).reshape(1, WC)                             # (1, W*C)

    kernel = partial(_dwconv3x3_kernel, C=C)

    cost = pl.CostEstimate(
        flops=2 * 9 * B * H * W * C,
        transcendentals=0,
        bytes_accessed=int((x_flat.size + halos.size + B * H * WC) * itemsize
                           + (w_flat.size + b_flat.size)
                           * jnp.dtype(weight.dtype).itemsize),
    )

    out = pl.pallas_call(
        kernel,
        out_shape=jax.ShapeDtypeStruct((B, H, WC), x.dtype),
        grid_spec=pltpu.PrefetchScalarGridSpec(
            num_scalar_prefetch=0,
            grid=(B, T),
            in_specs=[
                pl.BlockSpec((1, TH, WPC), lambda b, t: (b, t, 0)),
                pl.BlockSpec((1, 1, 2, WPC), lambda b, t: (b, t, 0, 0)),
                pl.BlockSpec((3, 3, WC), lambda b, t: (0, 0, 0)),
                pl.BlockSpec((1, WC), lambda b, t: (0, 0)),
            ],
            out_specs=pl.BlockSpec((1, TH, WC), lambda b, t: (b, t, 0)),
        ),
        compiler_params=pltpu.CompilerParams(
            dimension_semantics=("parallel", "parallel"),
            vmem_limit_bytes=32 * 1024 * 1024,
        ),
        cost_estimate=cost,
    )(x_flat, halos, w_flat, b_flat)

    return out.reshape(B, N, C)


def reference_dwconv(x, H, W, weight, bias):
    """Pure-JAX reference mirroring nn.Conv2d(dim, dim, 3, 1, 1, groups=dim)."""
    B, N, C = x.shape
    x_nhwc = x.reshape(B, H, W, C).astype(jnp.float32)
    xp = jnp.pad(x_nhwc, ((0, 0), (1, 1), (1, 1), (0, 0)))
    out = jnp.broadcast_to(bias.astype(jnp.float32), (B, H, W, C))
    for kh in range(3):
        for kw in range(3):
            out = out + xp[:, kh:kh + H, kw:kw + W, :] * weight[kh, kw, :].astype(jnp.float32)
    return out.reshape(B, N, C).astype(x.dtype)


if __name__ == "__main__":
    B, C, H, W = 2, 4, 16, 16
    N = H * W

    key = jax.random.PRNGKey(0)
    kx, kw, kb = jax.random.split(key, 3)

    x = jax.random.normal(kx, (B, N, C), dtype=jnp.float32)
    # PyTorch depthwise weight is (C, 1, 3, 3); stored here as (kh, kw, C).
    weight = jax.random.normal(kw, (3, 3, C), dtype=jnp.float32) * 0.1
    bias = jax.random.normal(kb, (C,), dtype=jnp.float32) * 0.1

    ref = reference_dwconv(x, H, W, weight, bias)

    # Two row tiles per image -> exercises the halo path and the (B, T) grid.
    out_tiled = jax.block_until_ready(dwconv(x, H, W, weight, bias, block_rows=8))
    # Auto-picked tile (single tile at this small size) -> exercises T == 1.
    out_auto = jax.block_until_ready(dwconv(x, H, W, weight, bias))

    assert out_tiled.shape == (B, N, C)
    assert jnp.allclose(out_tiled, ref, atol=1e-5, rtol=1e-5), "tiled kernel mismatch vs reference"
    assert jnp.allclose(out_auto, ref, atol=1e-5, rtol=1e-5), "auto-tiled kernel mismatch vs reference"

    print("KERNEL_OK")
</pallas_src>

<mosaic_0001>
module attributes {stable_mosaic.version = 11 : i64} {
  func.func @_dwconv3x3_kernel(%arg0: i32, %arg1: i32, %arg2: memref<1x8x72xf32, #tpu.memory_space<vmem>>, %arg3: memref<1x1x2x72xf32, #tpu.memory_space<vmem>>, %arg4: memref<3x3x64xf32, #tpu.memory_space<vmem>>, %arg5: memref<1x64xf32, #tpu.memory_space<vmem>>, %arg6: memref<1x8x64xf32, #tpu.memory_space<vmem>>) attributes {dimension_semantics = [#tpu.dimension_semantics<parallel>, #tpu.dimension_semantics<parallel>], iteration_bounds = array<i64: 2, 2>, scalar_prefetch = 0 : i64, scratch_operands = 0 : i64, tpu.core_type = #tpu.core_type<tc>, window_params = [{transform_indices = @transform_0, window_bounds = array<i64: 1, 8, 72>}, {transform_indices = @transform_1, window_bounds = array<i64: 1, 1, 2, 72>}, {pipeline_mode = #tpu.pipeline_mode<synchronous>, transform_indices = @transform_2, window_bounds = array<i64: 3, 3, 64>}, {pipeline_mode = #tpu.pipeline_mode<synchronous>, transform_indices = @transform_3, window_bounds = array<i64: 1, 64>}, {transform_indices = @transform_4, window_bounds = array<i64: 1, 8, 64>}]} {
    %c0 = arith.constant 0 : index
    %c0_0 = arith.constant 0 : index
    %c0_1 = arith.constant 0 : index
    %0 = vector.load %arg2[%c0, %c0_0, %c0_1] : memref<1x8x72xf32, #tpu.memory_space<vmem>>, vector<1x8x72xf32>
    %1 = vector.shape_cast %0 : vector<1x8x72xf32> to vector<8x72xf32>
    %c0_2 = arith.constant 0 : index
    %c0_3 = arith.constant 0 : index
    %c0_4 = arith.constant 0 : index
    %c0_5 = arith.constant 0 : index
    %2 = vector.load %arg3[%c0_2, %c0_3, %c0_4, %c0_5] : memref<1x1x2x72xf32, #tpu.memory_space<vmem>>, vector<1x1x2x72xf32>
    %3 = vector.shape_cast %2 : vector<1x1x2x72xf32> to vector<2x72xf32>
    %c0_6 = arith.constant 0 : index
    %c0_7 = arith.constant 0 : index
    %c0_8 = arith.constant 0 : index
    %4 = vector.load %arg4[%c0_6, %c0_7, %c0_8] : memref<3x3x64xf32, #tpu.memory_space<vmem>>, vector<3x3x64xf32>
    %5 = vector.extract_strided_slice %3 {offsets = [0, 0], sizes = [1, 72], strides = [1, 1]} : vector<2x72xf32> to vector<1x72xf32>
    %6 = vector.extract_strided_slice %3 {offsets = [1, 0], sizes = [1, 72], strides = [1, 1]} : vector<2x72xf32> to vector<1x72xf32>
    %7 = tpu.concatenate %5, %1, %6 in 0 : vector<1x72xf32>, vector<8x72xf32>, vector<1x72xf32> -> vector<10x72xf32>
    %c0_9 = arith.constant 0 : index
    %c0_10 = arith.constant 0 : index
    %8 = vector.load %arg5[%c0_9, %c0_10] : memref<1x64xf32, #tpu.memory_space<vmem>>, vector<1x64xf32>
    %9 = vector.shape_cast %8 : vector<1x64xf32> to vector<1x64xf32>
    %10 = vector.broadcast %9 : vector<1x64xf32> to vector<8x64xf32>
    %11 = vector.extract_strided_slice %7 {offsets = [0, 0], sizes = [10, 64], strides = [1, 1]} : vector<10x72xf32> to vector<10x64xf32>
    %12 = vector.extract_strided_slice %11 {offsets = [0, 0], sizes = [8, 64], strides = [1, 1]} : vector<10x64xf32> to vector<8x64xf32>
    %13 = vector.extract_strided_slice %4 {offsets = [0, 0, 0], sizes = [1, 1, 64], strides = [1, 1, 1]} : vector<3x3x64xf32> to vector<1x1x64xf32>
    %14 = vector.shape_cast %13 : vector<1x1x64xf32> to vector<64xf32>
    %15 = vector.shape_cast %14 : vector<64xf32> to vector<1x64xf32>
    %16 = vector.broadcast %15 : vector<1x64xf32> to vector<8x64xf32>
    %17 = arith.mulf %12, %16 : vector<8x64xf32>
    %18 = arith.addf %10, %17 : vector<8x64xf32>
    %19 = vector.extract_strided_slice %11 {offsets = [1, 0], sizes = [8, 64], strides = [1, 1]} : vector<10x64xf32> to vector<8x64xf32>
    %20 = vector.extract_strided_slice %4 {offsets = [1, 0, 0], sizes = [1, 1, 64], strides = [1, 1, 1]} : vector<3x3x64xf32> to vector<1x1x64xf32>
    %21 = vector.shape_cast %20 : vector<1x1x64xf32> to vector<64xf32>
    %22 = vector.shape_cast %21 : vector<64xf32> to vector<1x64xf32>
    %23 = vector.broadcast %22 : vector<1x64xf32> to vector<8x64xf32>
    %24 = arith.mulf %19, %23 : vector<8x64xf32>
    %25 = arith.addf %18, %24 : vector<8x64xf32>
    %26 = vector.extract_strided_slice %11 {offsets = [2, 0], sizes = [8, 64], strides = [1, 1]} : vector<10x64xf32> to vector<8x64xf32>
    %27 = vector.extract_strided_slice %4 {offsets = [2, 0, 0], sizes = [1, 1, 64], strides = [1, 1, 1]} : vector<3x3x64xf32> to vector<1x1x64xf32>
    %28 = vector.shape_cast %27 : vector<1x1x64xf32> to vector<64xf32>
    %29 = vector.shape_cast %28 : vector<64xf32> to vector<1x64xf32>
    %30 = vector.broadcast %29 : vector<1x64xf32> to vector<8x64xf32>
    %31 = arith.mulf %26, %30 : vector<8x64xf32>
    %32 = arith.addf %25, %31 : vector<8x64xf32>
    %33 = vector.extract_strided_slice %7 {offsets = [0, 4], sizes = [10, 64], strides = [1, 1]} : vector<10x72xf32> to vector<10x64xf32>
    %34 = vector.extract_strided_slice %33 {offsets = [0, 0], sizes = [8, 64], strides = [1, 1]} : vector<10x64xf32> to vector<8x64xf32>
    %35 = vector.extract_strided_slice %4 {offsets = [0, 1, 0], sizes = [1, 1, 64], strides = [1, 1, 1]} : vector<3x3x64xf32> to vector<1x1x64xf32>
    %36 = vector.shape_cast %35 : vector<1x1x64xf32> to vector<64xf32>
    %37 = vector.shape_cast %36 : vector<64xf32> to vector<1x64xf32>
    %38 = vector.broadcast %37 : vector<1x64xf32> to vector<8x64xf32>
    %39 = arith.mulf %34, %38 : vector<8x64xf32>
    %40 = arith.addf %32, %39 : vector<8x64xf32>
    %41 = vector.extract_strided_slice %33 {offsets = [1, 0], sizes = [8, 64], strides = [1, 1]} : vector<10x64xf32> to vector<8x64xf32>
    %42 = vector.extract_strided_slice %4 {offsets = [1, 1, 0], sizes = [1, 1, 64], strides = [1, 1, 1]} : vector<3x3x64xf32> to vector<1x1x64xf32>
    %43 = vector.shape_cast %42 : vector<1x1x64xf32> to vector<64xf32>
    %44 = vector.shape_cast %43 : vector<64xf32> to vector<1x64xf32>
    %45 = vector.broadcast %44 : vector<1x64xf32> to vector<8x64xf32>
    %46 = arith.mulf %41, %45 : vector<8x64xf32>
    %47 = arith.addf %40, %46 : vector<8x64xf32>
    %48 = vector.extract_strided_slice %33 {offsets = [2, 0], sizes = [8, 64], strides = [1, 1]} : vector<10x64xf32> to vector<8x64xf32>
    %49 = vector.extract_strided_slice %4 {offsets = [2, 1, 0], sizes = [1, 1, 64], strides = [1, 1, 1]} : vector<3x3x64xf32> to vector<1x1x64xf32>
    %50 = vector.shape_cast %49 : vector<1x1x64xf32> to vector<64xf32>
    %51 = vector.shape_cast %50 : vector<64xf32> to vector<1x64xf32>
    %52 = vector.broadcast %51 : vector<1x64xf32> to vector<8x64xf32>
    %53 = arith.mulf %48, %52 : vector<8x64xf32>
    %54 = arith.addf %47, %53 : vector<8x64xf32>
    %55 = vector.extract_strided_slice %7 {offsets = [0, 8], sizes = [10, 64], strides = [1, 1]} : vector<10x72xf32> to vector<10x64xf32>
    %56 = vector.extract_strided_slice %55 {offsets = [0, 0], sizes = [8, 64], strides = [1, 1]} : vector<10x64xf32> to vector<8x64xf32>
    %57 = vector.extract_strided_slice %4 {offsets = [0, 2, 0], sizes = [1, 1, 64], strides = [1, 1, 1]} : vector<3x3x64xf32> to vector<1x1x64xf32>
    %58 = vector.shape_cast %57 : vector<1x1x64xf32> to vector<64xf32>
    %59 = vector.shape_cast %58 : vector<64xf32> to vector<1x64xf32>
    %60 = vector.broadcast %59 : vector<1x64xf32> to vector<8x64xf32>
    %61 = arith.mulf %56, %60 : vector<8x64xf32>
    %62 = arith.addf %54, %61 : vector<8x64xf32>
    %63 = vector.extract_strided_slice %55 {offsets = [1, 0], sizes = [8, 64], strides = [1, 1]} : vector<10x64xf32> to vector<8x64xf32>
    %64 = vector.extract_strided_slice %4 {offsets = [1, 2, 0], sizes = [1, 1, 64], strides = [1, 1, 1]} : vector<3x3x64xf32> to vector<1x1x64xf32>
    %65 = vector.shape_cast %64 : vector<1x1x64xf32> to vector<64xf32>
    %66 = vector.shape_cast %65 : vector<64xf32> to vector<1x64xf32>
    %67 = vector.broadcast %66 : vector<1x64xf32> to vector<8x64xf32>
    %68 = arith.mulf %63, %67 : vector<8x64xf32>
    %69 = arith.addf %62, %68 : vector<8x64xf32>
    %70 = vector.extract_strided_slice %55 {offsets = [2, 0], sizes = [8, 64], strides = [1, 1]} : vector<10x64xf32> to vector<8x64xf32>
    %71 = vector.extract_strided_slice %4 {offsets = [2, 2, 0], sizes = [1, 1, 64], strides = [1, 1, 1]} : vector<3x3x64xf32> to vector<1x1x64xf32>
    %72 = vector.shape_cast %71 : vector<1x1x64xf32> to vector<64xf32>
    %73 = vector.shape_cast %72 : vector<64xf32> to vector<1x64xf32>
    %74 = vector.broadcast %73 : vector<1x64xf32> to vector<8x64xf32>
    %75 = arith.mulf %70, %74 : vector<8x64xf32>
    %76 = arith.addf %69, %75 : vector<8x64xf32>
    %c0_11 = arith.constant 0 : index
    %c0_12 = arith.constant 0 : index
    %c0_13 = arith.constant 0 : index
    %77 = vector.load %arg6[%c0_11, %c0_12, %c0_13] : memref<1x8x64xf32, #tpu.memory_space<vmem>>, vector<1x8x64xf32>
    %78 = vector.shape_cast %77 : vector<1x8x64xf32> to vector<8x64xf32>
    %79 = vector.shape_cast %76 : vector<8x64xf32> to vector<1x8x64xf32>
    tpu.vector_store %arg6[%c0_11, %c0_12, %c0_13], %79 {strides = array<i32>} : memref<1x8x64xf32, #tpu.memory_space<vmem>>, vector<1x8x64xf32>,
    return
  }
  func.func @transform_0(%arg0: i32, %arg1: i32) -> (i32, i32, i32) {
    %c0_i32 = arith.constant 0 : i32
    %c0_i32_0 = arith.constant 0 : i32
    return %arg0, %arg1, %c0_i32 : i32, i32, i32
  }
  func.func @transform_1(%arg0: i32, %arg1: i32) -> (i32, i32, i32, i32) {
    %c0_i32 = arith.constant 0 : i32
    %c0_i32_0 = arith.constant 0 : i32
    %c0_i32_1 = arith.constant 0 : i32
    return %arg0, %arg1, %c0_i32, %c0_i32_0 : i32, i32, i32, i32
  }
  func.func @transform_2(%arg0: i32, %arg1: i32) -> (i32, i32, i32) {
    %c0_i32 = arith.constant 0 : i32
    %c0_i32_0 = arith.constant 0 : i32
    %c0_i32_1 = arith.constant 0 : i32
    %c0_i32_2 = arith.constant 0 : i32
    return %c0_i32, %c0_i32_0, %c0_i32_1 : i32, i32, i32
  }
  func.func @transform_3(%arg0: i32, %arg1: i32) -> (i32, i32) {
    %c0_i32 = arith.constant 0 : i32
    %c0_i32_0 = arith.constant 0 : i32
    %c0_i32_1 = arith.constant 0 : i32
    return %c0_i32, %c0_i32_0 : i32, i32
  }
  func.func @transform_4(%arg0: i32, %arg1: i32) -> (i32, i32, i32) {
    %c0_i32 = arith.constant 0 : i32
    %c0_i32_0 = arith.constant 0 : i32
    return %arg0, %arg1, %c0_i32 : i32, i32, i32
  }
}

</mosaic_0001>

<llo_original>
// kernel: tpu_custom_call.1
$region0: #{tpu_custom_call.1}
  #allocation0 [shape = 'u32[]', space=smem, size = 0x4, offset = 0x4, fixed_abs, tag = 'smem constant byte address 0x4 - core index']
  #allocation1 [shape = 'u32[144,128]{1,0:T(1,128)}', space=vmem, size = 0x12000, scoped, tag = 'internal scratch']
  %s0 = inlined_call_operand.hbm [shape: f32[2,16,72], index: 0, kind: input, shape index: {}]
  %s1 = inlined_call_operand.hbm [shape: f32[2,2,2,72], index: 1, kind: input, shape index: {}]
  %s2 = inlined_call_operand.hbm [shape: f32[3,3,64], index: 2, kind: input, shape index: {}]
  %s3 = inlined_call_operand.vmem [shape: f32[1,64], index: 3, kind: input, shape index: {}]
  %s4 = inlined_call_operand.hbm [shape: f32[2,16,64], index: 4, kind: output, shape index: {}]
  %s5 = sld [smem:[#allocation0]]
  $region61: #{tpu_custom_call.1} parent=0
    _
  %s7 = ssub.s32 1, %s5
  %s8 = scalar_select 0, %s7, %s5
  $region1: #{tpu_custom_call.1} parent=0
    #allocation2 [shape = 'u8[8192]{0}', space=vmem, size = 0x2000, scoped, tag = 'input window, operand 0']
    #allocation3 [shape = 's32[2]{0}', space=sflag, size = 0x8, scoped, tag = 'scoped memory for tpu_custom_call.1']
    #allocation4 [shape = 's32[2]{0}', space=sflag, size = 0x8, scoped, tag = 'scoped memory for tpu_custom_call.1']
    #allocation5 [shape = 'u8[2048]{0}', space=vmem, size = 0x800, scoped, tag = 'input window, operand 1']
    #allocation6 [shape = 's32[2]{0}', space=sflag, size = 0x8, scoped, tag = 'scoped memory for tpu_custom_call.1']
    #allocation7 [shape = 'u8[6144]{0}', space=vmem, size = 0x1800, scoped, tag = 'input window, operand 2, single buffered']
    #allocation8 [shape = 'u8[8192]{0}', space=vmem, size = 0x2000, scoped, tag = 'output window, operand 0']
    %9 = vsyncpa [#allocation3], 0
    %s10 = scalar_lea.sflag [#allocation3], 1
    %11 = vsyncpa %s10, 0
    %12 = vsyncpa [#allocation6], 0
    %s13 = scalar_lea.sflag [#allocation6], 1
    %14 = vsyncpa %s13, 0
    %15 = vsyncpa [#allocation4], 0
    %s16 = scalar_lea.sflag [#allocation4], 1
    %17 = vsyncpa %s16, 0
    loop: start=0, step=1, limit=6
    $region2: #{tpu_custom_call.1} parent=1 // loop_pre_header
      _
    $region3: #{tpu_custom_call.1} parent=1 // loop_header
      %s19 = sphi 0, %s23
      %p20 = scmp.ge.s32.totalorder %s19, 6
      %s26 = sphi 0, %s38
      %s27 = sphi 0, %s34
      %s28 = sphi 0, %s26
      %s29 = sphi 0, %s27
      %s30 = sphi 0, %s28
      %s31 = sphi 0, %s29
      %s43 = sphi 0, %s45
      %s46 = sphi 0, %s43
      %s47 = sphi 0, %s46
      %s63 = sphi 0, %s47
      %s71 = sphi 0, %s73
      %s74 = sphi 0, %s71
      %s75 = sphi 0, %s74
      %s91 = sphi 0, %s75
      %s95 = sphi 0, %s95
      %s97 = sphi 0, %s95
      %s98 = sphi 0, %s97
      %s112 = sphi 0, %s98
      %s116 = sphi 0, %s116
      %s118 = sphi 0, %s116
      %s119 = sphi 0, %s118
      %s133 = sphi 0, %s119
      %s141 = sphi 0, %s143
      %s144 = sphi 0, %s141
      %s145 = sphi 0, %s144
      %s161 = sphi 0, %s145
    $region4: #{tpu_custom_call.1} parent=1 // loop_header_branch
      %22 = sbr.rel (%p20) target = $region8
    $region5: #{tpu_custom_call.1} parent=1 // loop_body
      %s24 = ssub.s32 %s19, 1
      %s25 = ssub.s32 %s19, 2
      %s32 = sadd.s32 1, %s27
      %p33 = scmp.ge.s32.totalorder %s32, 2
      %s34 = scalar_select %p33, 0, %s32
      %s35 = sadd.s32 1, %s26
      %s36 = scalar_select %p33, %s35, %s26
      %p37 = scmp.ge.s32.totalorder %s36, 2
      %s38 = scalar_select %p37, 0, %s36
      %s39 = ssub.s32 %s26, %s38
      %s40 = ssub.s32 %s27, %s34
      %s41 = sor.u32 %s39, %s40
      %p42 = scmp.eq.s32.totalorder %s41, 0
      %s44 = sadd.s32 %s43, 1
      %s45 = scalar_select %p42, %s43, %s44
      %p48 = pneg %p42
      %p49 = scmp.eq.s32.totalorder %s19, 3
      %p50 = por %p48, %p49
      %p51 = scmp.ne.s32.totalorder %s43, %s46
      %p52 = scmp.eq.s32.totalorder %s19, 0
      %p53 = por %p51, %p52
      %p54 = scmp.ne.s32.totalorder %s43, %s46
      %p55 = scmp.eq.s32.totalorder %s24, 3
      %p56 = por %p54, %p55
      %p57 = scmp.ne.s32.totalorder %s46, %s47
      %p58 = scmp.eq.s32.totalorder %s24, 0
      %p59 = por %p57, %p58
      %p60 = scmp.ne.s32.totalorder %s46, %s47
      %p61 = scmp.eq.s32.totalorder %s25, 3
      %p62 = por %p60, %p61
      %p64 = scmp.ne.s32.totalorder %s47, %s63
      %p65 = scmp.eq.s32.totalorder %s25, 0
      %p66 = por %p64, %p65
      %s67 = ssub.s32 %s26, %s38
      %s68 = ssub.s32 %s27, %s34
      %s69 = sor.u32 %s67, %s68
      %p70 = scmp.eq.s32.totalorder %s69, 0
      %s72 = sadd.s32 %s71, 1
      %s73 = scalar_select %p70, %s71, %s72
      %p76 = pneg %p70
      %p77 = scmp.eq.s32.totalorder %s19, 3
      %p78 = por %p76, %p77
      %p79 = scmp.ne.s32.totalorder %s71, %s74
      %p80 = scmp.eq.s32.totalorder %s19, 0
      %p81 = por %p79, %p80
      %p82 = scmp.ne.s32.totalorder %s71, %s74
      %p83 = scmp.eq.s32.totalorder %s24, 3
      %p84 = por %p82, %p83
      %p85 = scmp.ne.s32.totalorder %s74, %s75
      %p86 = scmp.eq.s32.totalorder %s24, 0
      %p87 = por %p85, %p86
      %p88 = scmp.ne.s32.totalorder %s74, %s75
      %p89 = scmp.eq.s32.totalorder %s25, 3
      %p90 = por %p88, %p89
      %p92 = scmp.ne.s32.totalorder %s75, %s91
      %p93 = scmp.eq.s32.totalorder %s25, 0
      %p94 = por %p92, %p93
      %s96 = sadd.s32 %s95, 1
      %p99 = scmp.eq.s32.totalorder %s19, 3
      %p100 = scmp.ne.s32.totalorder %s95, %s97
      %p101 = scmp.eq.s32.totalorder %s19, 0
      %p102 = por %p100, %p101
      %p103 = scmp.ne.s32.totalorder %s95, %s97
      %p104 = scmp.eq.s32.totalorder %s24, 3
      %p105 = por %p103, %p104
      %p106 = scmp.ne.s32.totalorder %s97, %s98
      %p107 = scmp.eq.s32.totalorder %s24, 0
      %p108 = por %p106, %p107
      %p109 = scmp.ne.s32.totalorder %s97, %s98
      %p110 = scmp.eq.s32.totalorder %s25, 3
      %p111 = por %p109, %p110
      %p113 = scmp.ne.s32.totalorder %s98, %s112
      %p114 = scmp.eq.s32.totalorder %s25, 0
      %p115 = por %p113, %p114
      %s117 = sadd.s32 %s116, 1
      %p120 = scmp.eq.s32.totalorder %s19, 3
      %p121 = scmp.ne.s32.totalorder %s116, %s118
      %p122 = scmp.eq.s32.totalorder %s19, 0
      %p123 = por %p121, %p122
      %p124 = scmp.ne.s32.totalorder %s116, %s118
      %p125 = scmp.eq.s32.totalorder %s24, 3
      %p126 = por %p124, %p125
      %p127 = scmp.ne.s32.totalorder %s118, %s119
      %p128 = scmp.eq.s32.totalorder %s24, 0
      %p129 = por %p127, %p128
      %p130 = scmp.ne.s32.totalorder %s118, %s119
      %p131 = scmp.eq.s32.totalorder %s25, 3
      %p132 = por %p130, %p131
      %p134 = scmp.ne.s32.totalorder %s119, %s133
      %p135 = scmp.eq.s32.totalorder %s25, 0
      %p136 = por %p134, %p135
      %s137 = ssub.s32 %s26, %s38
      %s138 = ssub.s32 %s27, %s34
      %s139 = sor.u32 %s137, %s138
      %p140 = scmp.eq.s32.totalorder %s139, 0
      %s142 = sadd.s32 %s141, 1
      %s143 = scalar_select %p140, %s141, %s142
      %p146 = pneg %p140
      %p147 = scmp.eq.s32.totalorder %s19, 3
      %p148 = por %p146, %p147
      %p149 = scmp.ne.s32.totalorder %s141, %s144
      %p150 = scmp.eq.s32.totalorder %s19, 0
      %p151 = por %p149, %p150
      %p152 = scmp.ne.s32.totalorder %s141, %s144
      %p153 = scmp.eq.s32.totalorder %s24, 3
      %p154 = por %p152, %p153
      %p155 = scmp.ne.s32.totalorder %s144, %s145
      %p156 = scmp.eq.s32.totalorder %s24, 0
      %p157 = por %p155, %p156
      %p158 = scmp.ne.s32.totalorder %s144, %s145
      %p159 = scmp.eq.s32.totalorder %s25, 3
      %p160 = por %p158, %p159
      %p162 = scmp.ne.s32.totalorder %s145, %s161
      %p163 = scmp.eq.s32.totalorder %s25, 0
      %p164 = por %p162, %p163
      %p165 = scmp.le.s32.totalorder 1, %s19
      %p166 = scmp.lt.s32.totalorder %s19, 5
      %p167 = pnand %p165, %p166
      %p168 = pneg %p167
      // Predicated region
      $region9: #{tpu_custom_call.1} parent=5 // pred_check
        _
      $region10: #{tpu_custom_call.1} parent=5 // pred_check_branch
        %170 = sbr.rel (%p167) target = $region12
      $region11: #{tpu_custom_call.1} parent=5 // pred_region
        %s171 = ssub.s32 %s19, 1
        // Predicated region
        $region13: #{tpu_custom_call.1} parent=11 // pred_check
          %p172 = pneg %p108
        $region14: #{tpu_custom_call.1} parent=11 // pred_check_branch
          %174 = sbr.rel (%p172) target = $region16
        $region15: #{tpu_custom_call.1} parent=11 // pred_region
          %s176 = ssub.s32 192, 192
          %177 = vsyncadd [#allocation6], %s176
          %s178 = sshll.u32 [#allocation7], 4
          %s179 = int_to_ptr.vmem [resolvable:$true] %s178
          %184 = dma.hbm_to_vmem [thread:$0]  %s2, 192, %s179, [#allocation6], 64, 64, 4
        $region16: #{tpu_custom_call.1} parent=11 // pred_fallthru
          _
        // Predicated region
        $region17: #{tpu_custom_call.1} parent=11 // pred_check
          %p185 = pneg %p129
        $region18: #{tpu_custom_call.1} parent=11 // pred_check_branch
          %187 = sbr.rel (%p185) target = $region20
        $region19: #{tpu_custom_call.1} parent=11 // pred_region
          _
        $region20: #{tpu_custom_call.1} parent=11 // pred_fallthru
          _
      $region12: #{tpu_custom_call.1} parent=5 // pred_fallthru
        _
      %p188 = scmp.lt.s32.totalorder %s19, 4
      // Predicated region
      $region21: #{tpu_custom_call.1} parent=5 // pred_check
        %p189 = pneg %p188
      $region22: #{tpu_custom_call.1} parent=5 // pred_check_branch
        %191 = sbr.rel (%p189) target = $region24
      $region23: #{tpu_custom_call.1} parent=5 // pred_region
        // Predicated region
        $region25: #{tpu_custom_call.1} parent=23 // pred_check
          %p192 = pneg %p53
        $region26: #{tpu_custom_call.1} parent=23 // pred_check_branch
          %194 = sbr.rel (%p192) target = $region28
        $region27: #{tpu_custom_call.1} parent=23 // pred_region
          %s195 = sand.u32 %s43, 1
          %s196 = scalar_lea.sflag [#allocation3], %s195
          %s197 = sand.u32 %s43, 1
          %s198 = smul.addr %s197, 8
          %s199 = scalar_lea.vmem [#allocation2], %s198
          %s201 = ssub.s32 128, 128
          %202 = vsyncadd %s196, %s201
          %s203 = smul.addr %s26, 2
          %s204 = sadd.s32 %s27, %s203
          %s205 = smul.addr %s204, 128
          %s206 = scalar_lea.hbm %s0, %s205
          %s208 = sshll.u32 %s199, 4
          %s209 = int_to_ptr.vmem [resolvable:$true] %s208
          %211 = dma.hbm_to_vmem [thread:$0]  %s206, 128, %s209, %s196
        $region28: #{tpu_custom_call.1} parent=23 // pred_fallthru
          _
        // Predicated region
        $region29: #{tpu_custom_call.1} parent=23 // pred_check
          %p212 = pneg %p81
        $region30: #{tpu_custom_call.1} parent=23 // pred_check_branch
          %214 = sbr.rel (%p212) target = $region32
        $region31: #{tpu_custom_call.1} parent=23 // pred_region
          %s215 = sand.u32 %s19, 1
          %s216 = scalar_lea.sflag [#allocation6], %s215
          %s217 = sand.u32 %s71, 1
          %s218 = smul.addr %s217, 2
          %s219 = scalar_lea.vmem [#allocation5], %s218
          %s221 = ssub.s32 32, 32
          %222 = vsyncadd %s216, %s221
          %s223 = smul.addr %s26, 2
          %s224 = sadd.s32 %s27, %s223
          %s225 = smul.addr %s224, 32
          %s226 = scalar_lea.hbm %s1, %s225
          %s228 = sshll.u32 %s219, 4
          %s229 = int_to_ptr.vmem [resolvable:$true] %s228
          %231 = dma.hbm_to_vmem [thread:$0]  %s226, 32, %s229, %s216
        $region32: #{tpu_custom_call.1} parent=23 // pred_fallthru
          _
      $region24: #{tpu_custom_call.1} parent=5 // pred_fallthru
        _
      %p232 = scmp.le.s32.totalorder 1, %s19
      %p233 = scmp.lt.s32.totalorder %s19, 5
      %p234 = pnand %p232, %p233
      %p235 = pneg %p234
      // Predicated region
      $region33: #{tpu_custom_call.1} parent=5 // pred_check
        _
      $region34: #{tpu_custom_call.1} parent=5 // pred_check_branch
        %237 = sbr.rel (%p234) target = $region36
      $region35: #{tpu_custom_call.1} parent=5 // pred_region
        %s238 = ssub.s32 %s19, 1
        %s239 = sand.u32 %s46, 1
        %s240 = scalar_lea.sflag [#allocation3], %s239
        %s241 = sand.u32 %s46, 1
        %s242 = smul.addr %s241, 8
        %s243 = scalar_lea.vmem [#allocation2], %s242
        // Predicated region
        $region37: #{tpu_custom_call.1} parent=35 // pred_check
          %p244 = pneg %p59
        $region38: #{tpu_custom_call.1} parent=35 // pred_check_branch
          %246 = sbr.rel (%p244) target = $region40
        $region39: #{tpu_custom_call.1} parent=35 // pred_region
          %247 = dma.done %s240, 128
        $region40: #{tpu_custom_call.1} parent=35 // pred_fallthru
          _
        %s248 = sand.u32 %s24, 1
        %s249 = scalar_lea.sflag [#allocation6], %s248
        %s250 = sand.u32 %s74, 1
        %s251 = smul.addr %s250, 2
        %s252 = scalar_lea.vmem [#allocation5], %s251
        // Predicated region
        $region41: #{tpu_custom_call.1} parent=35 // pred_check
          %p253 = pneg %p87
        $region42: #{tpu_custom_call.1} parent=35 // pred_check_branch
          %255 = sbr.rel (%p253) target = $region44
        $region43: #{tpu_custom_call.1} parent=35 // pred_region
          %256 = dma.done %s249, 32
        $region44: #{tpu_custom_call.1} parent=35 // pred_fallthru
          _
        // Predicated region
        $region45: #{tpu_custom_call.1} parent=35 // pred_check
          %p257 = pneg %p108
        $region46: #{tpu_custom_call.1} parent=35 // pred_check_branch
          %259 = sbr.rel (%p257) target = $region48
        $region47: #{tpu_custom_call.1} parent=35 // pred_region
          %260 = dma.done [#allocation6], 192
        $region48: #{tpu_custom_call.1} parent=35 // pred_fallthru
          _
        %s261 = sand.u32 %s46, 1
        %s262 = scalar_lea.sflag [#allocation3], %s261
        %s263 = sand.u32 %s46, 1
        %s264 = smul.addr %s263, 8
        %s265 = scalar_lea.vmem [#allocation2], %s264
        %p266 = pneg %p59
        %p267 = pneg %p56
        %s268 = sand.u32 %s24, 1
        %s269 = scalar_lea.sflag [#allocation6], %s268
        %s270 = sand.u32 %s74, 1
        %s271 = smul.addr %s270, 2
        %s272 = scalar_lea.vmem [#allocation5], %s271
        %p273 = pneg %p87
        %p274 = pneg %p84
        %p275 = pneg %p108
        %p276 = pneg %p105
        %p277 = pneg %p129
        %p278 = pneg %p126
        %p279 = pneg %p157
        %p280 = pneg %p154
        %s281 = sand.u32 %s144, 1
        %s282 = scalar_lea.sflag [#allocation4], %s281
        %s283 = sand.u32 %s144, 1
        %s284 = smul.addr %s283, 8
        %s285 = scalar_lea.vmem [#allocation8], %s284
        %v286 = vld [vmem:[%s243] sm:$0xff]
        %v287 = vld [vmem:[%s252] sm:$0x3]
        %v288 = vld [vmem:[#allocation7] sm:$0x7]
        %v289 = vld [vmem:[#allocation7 + $0x4] sm:$0x7]
        %v290 = vld [vmem:[#allocation7 + $0x8] sm:$0x7]
        %v292 = vrot.slane %v286, 7
        %vm294 = vcmask 1040384
        %v295 = vsel %vm294, %v287, %v292
        %v296 = vsel %vm294, %v292, %v287
        %v297 = vld [vmem:[%s3] sm:$0x1]
        %v299 = vlaneseq
        %v300 = vshrl.u32 %v299, 7
        %v301 = vsub.s32 0, %v300
        %v302 = vrot.slane %v297, %v301
        %v304 = vlaneseq
        %v305 = vshrl.u32 %v304, 7
        %v306 = vsub.s32 0, %v305
        %v307 = vrot.slane %v288, %v306
        %v308 = vmul.f32 %v295, %v307
        %v309 = vadd.f32 %v302, %v308
        %v310 = vlaneseq
        %v311 = vshrl.u32 %v310, 7
        %v312 = vsub.s32 0, %v311
        %v313 = vrot.slane %v289, %v312
        %v314 = vmul.f32 %v295, %v313
        %v315 = vmul.f32 %v296, %v313
        %vm318 = vcmask 1046528
        %v319 = vrot.slane %v314, 1
        %v320 = vrot.slane %v315, 1
        %v321 = vsel %vm318, %v319, %v320
        %v323 = vadd.f32 %v309, %v321
        %v324 = vlaneseq
        %v325 = vshrl.u32 %v324, 7
        %v326 = vsub.s32 0, %v325
        %v327 = vrot.slane %v290, %v326
        %v328 = vmul.f32 %v295, %v327
        %v329 = vmul.f32 %v296, %v327
        %vm332 = vcmask 1045504
        %v333 = vrot.slane %v328, 2
        %v334 = vrot.slane %v329, 2
        %v335 = vsel %vm332, %v333, %v334
        %v337 = vadd.f32 %v323, %v335
        %v338 = vlaneseq
        %v339 = vshrl.u32 %v338, 7
        %v340 = vsub.s32 1, %v339
        %v341 = vrot.slane %v288, %v340
        %343 = vrot.lane.b32.xlu0 %v341, 4
        %v344 = vpop.permute.xlu0 %343
        %v346 = vmul.f32 %v295, %v344
        %348 = vrot.lane.b32.xlu0 %v346, 124
        %v349 = vpop.permute.xlu0 %348
        %v351 = vadd.f32 %v337, %v349
        %v352 = vlaneseq
        %v353 = vshrl.u32 %v352, 7
        %v354 = vsub.s32 1, %v353
        %v355 = vrot.slane %v289, %v354
        %357 = vrot.lane.b32.xlu0 %v355, 4
        %v358 = vpop.permute.xlu0 %357
        %v360 = vmul.f32 %v295, %v358
        %v361 = vmul.f32 %v296, %v358
        %v364 = vrot.slane %v360, 1
        %v365 = vrot.slane %v361, 1
        %v366 = vsel %vm318, %v364, %v365
        %367 = vrot.lane.b32.xlu0 %v366, 124
        %v368 = vpop.permute.xlu0 %367
        %v370 = vadd.f32 %v351, %v368
        %v371 = vlaneseq
        %v372 = vshrl.u32 %v371, 7
        %v373 = vsub.s32 1, %v372
        %v374 = vrot.slane %v290, %v373
        %376 = vrot.lane.b32.xlu0 %v374, 4
        %v377 = vpop.permute.xlu0 %376
        %v379 = vmul.f32 %v295, %v377
        %v380 = vmul.f32 %v296, %v377
        %v383 = vrot.slane %v379, 2
        %v384 = vrot.slane %v380, 2
        %v385 = vsel %vm332, %v383, %v384
        %386 = vrot.lane.b32.xlu0 %v385, 124
        %v387 = vpop.permute.xlu0 %386
        %v389 = vadd.f32 %v370, %v387
        %v390 = vlaneseq
        %v391 = vshrl.u32 %v390, 7
        %v392 = vsub.s32 2, %v391
        %v393 = vrot.slane %v288, %v392
        %395 = vrot.lane.b32.xlu0 %v393, 8
        %v396 = vpop.permute.xlu0 %395
        %v398 = vmul.f32 %v295, %v396
        %400 = vrot.lane.b32.xlu0 %v398, 120
        %v401 = vpop.permute.xlu0 %400
        %v403 = vadd.f32 %v389, %v401
        %v404 = vlaneseq
        %v405 = vshrl.u32 %v404, 7
        %v406 = vsub.s32 2, %v405
        %v407 = vrot.slane %v289, %v406
        %409 = vrot.lane.b32.xlu0 %v407, 8
        %v410 = vpop.permute.xlu0 %409
        %v412 = vmul.f32 %v295, %v410
        %v413 = vmul.f32 %v296, %v410
        %v416 = vrot.slane %v412, 1
        %v417 = vrot.slane %v413, 1
        %v418 = vsel %vm318, %v416, %v417
        %419 = vrot.lane.b32.xlu0 %v418, 120
        %v420 = vpop.permute.xlu0 %419
        %v422 = vadd.f32 %v403, %v420
        %v423 = vlaneseq
        %v424 = vshrl.u32 %v423, 7
        %v425 = vsub.s32 2, %v424
        %v426 = vrot.slane %v290, %v425
        %428 = vrot.lane.b32.xlu0 %v426, 8
        %v429 = vpop.permute.xlu0 %428
        %v431 = vmul.f32 %v295, %v429
        %v432 = vmul.f32 %v296, %v429
        %v435 = vrot.slane %v431, 2
        %v436 = vrot.slane %v432, 2
        %v437 = vsel %vm332, %v435, %v436
        %438 = vrot.lane.b32.xlu0 %v437, 120
        %v439 = vpop.permute.xlu0 %438
        %v441 = vadd.f32 %v422, %v439
        %vm442 = vcmask 523264
        %443 = vst.msk [vmem:[%s285] sm:$0xff] %vm442, %v441
        %s444 = sand.u32 %s144, 1
        %s445 = scalar_lea.sflag [#allocation4], %s444
        %s446 = sand.u32 %s144, 1
        %s447 = smul.addr %s446, 8
        %s448 = scalar_lea.vmem [#allocation8], %s447
        // Predicated region
        $region49: #{tpu_custom_call.1} parent=35 // pred_check
          %p449 = pneg %p154
        $region50: #{tpu_custom_call.1} parent=35 // pred_check_branch
          %451 = sbr.rel (%p449) target = $region52
        $region51: #{tpu_custom_call.1} parent=35 // pred_region
          %s453 = ssub.s32 128, 128
          %454 = vsyncadd %s445, %s453
          %s455 = smul.addr %s28, 2
          %s456 = sadd.s32 %s29, %s455
          %s457 = smul.addr %s456, 128
          %s458 = scalar_lea.hbm %s4, %s457
          %s460 = sshll.u32 %s448, 4
          %s461 = int_to_ptr.vmem [resolvable:$true] %s460
          %463 = dma.vmem_to_hbm [thread:$0]  %s461, 128, %s458, %s445
        $region52: #{tpu_custom_call.1} parent=35 // pred_fallthru
          _
      $region36: #{tpu_custom_call.1} parent=5 // pred_fallthru
        _
      %p464 = scmp.le.s32.totalorder 2, %s19
      // Predicated region
      $region53: #{tpu_custom_call.1} parent=5 // pred_check
        %p465 = pneg %p464
      $region54: #{tpu_custom_call.1} parent=5 // pred_check_branch
        %467 = sbr.rel (%p465) target = $region56
      $region55: #{tpu_custom_call.1} parent=5 // pred_region
        %s468 = ssub.s32 %s19, 2
        // Predicated region
        $region57: #{tpu_custom_call.1} parent=55 // pred_check
          %p469 = pneg %p160
        $region58: #{tpu_custom_call.1} parent=55 // pred_check_branch
          %471 = sbr.rel (%p469) target = $region60
        $region59: #{tpu_custom_call.1} parent=55 // pred_region
          %s472 = sand.u32 %s145, 1
          %s473 = scalar_lea.sflag [#allocation4], %s472
          %s474 = sand.u32 %s145, 1
          %s475 = smul.addr %s474, 8
          %s476 = scalar_lea.vmem [#allocation8], %s475
          %477 = dma.done %s473, 128
        $region60: #{tpu_custom_call.1} parent=55 // pred_fallthru
          _
      $region56: #{tpu_custom_call.1} parent=5 // pred_fallthru
        _
    $region6: #{tpu_custom_call.1} parent=1 // loop_footer
      %s23 = sadd.s32 1, %s19
    $region7: #{tpu_custom_call.1} parent=1 // loop_footer_branch
      %18 = sbr.rel target = $region3
    $region8: #{tpu_custom_call.1} parent=1 // loop_exit
      _
    %478 = vsyncpa [#allocation3], 1
    %s479 = scalar_lea.sflag [#allocation3], 1
    %480 = vsyncpa %s479, 1
    %481 = vsyncpa [#allocation6], 1
    %s482 = scalar_lea.sflag [#allocation6], 1
    %483 = vsyncpa %s482, 1
    %484 = vsyncpa [#allocation4], 1
    %s485 = scalar_lea.sflag [#allocation4], 1
    %486 = vsyncpa %s485, 1

</llo_original>
